<compile_context>
chip_gen: v6e
topology: v6e:2x2x1
jax: 0.10.0
libtpu: 0.0.40
codegen_flags: <defaults>
</compile_context>

<pallas_src>
import functools

import jax
import jax.numpy as jnp
from jax.experimental import pallas as pl
from jax.experimental.pallas import tpu as pltpu


def _cdiv(a, b):
    return (a + b - 1) // b


def _round_up(a, b):
    return _cdiv(a, b) * b


def _label_smooth_kernel(x_ref, t_ref, o_ref, acc_ref, *,
                         smoothing, off_val, n_valid, rows_per_split, tb):
    """One grid step processes a (tb, C) logits tile + (tb, 1) targets.

    grid = (n_splits, steps):
      axis 0 ("parallel")  -> row split, one per TensorCore on v7x
      axis 1 ("arbitrary") -> reduction over row tiles within the split
    """
    c = pl.program_id(0)
    i = pl.program_id(1)

    @pl.when(i == 0)
    def _():
        acc_ref[...] = jnp.zeros_like(acc_ref)

    x = x_ref[...].astype(jnp.float32)            # (tb, C)
    t = t_ref[...]                                # (tb, 1) int32

    # Numerically stable log-sum-exp over the class (lane) axis.
    m = jnp.max(x, axis=-1, keepdims=True)                           # (tb, 1)
    lse = jnp.log(jnp.sum(jnp.exp(x - m), axis=-1, keepdims=True)) + m

    # x at the target class via iota + compare (no scatter / gather needed).
    class_ids = jax.lax.broadcasted_iota(jnp.int32, x.shape, 1)      # (tb, C)
    x_at_t = jnp.sum(jnp.where(class_ids == t, x, 0.0),
                     axis=-1, keepdims=True)                         # (tb, 1)
    x_sum = jnp.sum(x, axis=-1, keepdims=True)                       # (tb, 1)

    # sum(weight) == 1  =>  sum(-w * log_softmax(x)) = lse - sum(w * x)
    #                                              = lse - [(1-s-off)*x_t + off*sum(x)]
    row_loss = lse - ((1.0 - smoothing - off_val) * x_at_t + off_val * x_sum)

    # Mask padded rows (global row id >= true N).
    row0 = c * rows_per_split + i * tb
    row_ids = row0 + jax.lax.broadcasted_iota(jnp.int32, (tb, 1), 0)
    row_loss = jnp.where(row_ids < n_valid, row_loss, 0.0)

    acc_ref[...] += row_loss                                         # (tb, 1)

    @pl.when(i == pl.num_programs(1) - 1)
    def _():
        total = jnp.sum(acc_ref[...])
        o_ref[...] = jnp.broadcast_to(total, o_ref.shape).astype(o_ref.dtype)


def label_smooth_loss(logits, target, smoothing=0.1, *, n_splits=2,
                      vmem_limit_bytes=None):
    """JAX/Pallas equivalent of LabelSmoothLoss.forward(input, target)."""
    C = logits.shape[-1]
    x2 = logits.reshape(-1, C)                     # keep input dtype (bf16 stays bf16)
    t2 = target.reshape(-1, 1).astype(jnp.int32)   # (N, 1)
    N = x2.shape[0]

    if C > 1:
        off_val = float(smoothing) / (C - 1.0)
    else:
        off_val = 0.0  # TODO(synk): degenerate C == 1 case (PyTorch loss is 0 there)

    # Generation-aware scoped-VMEM limit (v5e/v6e: 128 MiB phys, v7x: 64 MiB).
    if vmem_limit_bytes is None:
        try:
            phys = int(pltpu.get_tpu_info().vmem_capacity_bytes)
        except Exception:
            phys = 64 << 20                      # conservative (v7x per-TC)
        vmem_limit_bytes = int(min(phys - (8 << 20), 100 << 20))

    # Pick the biggest row tile whose working set fits comfortably:
    #   2 * C * itemsize   double-buffered input tile
    #   4 * C * 4          f32 elementwise temporaries over (tb, C)
    #   ~2048 B/row        lane-padded (tb, 1) columns (targets x2, acc, temps)
    in_itemsize = jnp.dtype(x2.dtype).itemsize
    bytes_per_row = 2 * C * in_itemsize + 4 * C * 4 + 2048
    tb = max(8, ((vmem_limit_bytes // 2) // bytes_per_row) // 8 * 8)
    # TODO(synk): very large C (>= ~128K) needs a class-axis tiling path with
    # an online logsumexp instead of a full (tb, C) row in VMEM.

    per_split = _cdiv(N, n_splits)
    tb = min(tb, _round_up(per_split, 8))
    steps = _cdiv(per_split, tb)
    rows_per_split = steps * tb
    Np = n_splits * rows_per_split

    if Np != N:
        x2 = jnp.pad(x2, ((0, Np - N), (0, 0)))
        t2 = jnp.pad(t2, ((0, Np - N), (0, 0)))

    kernel = functools.partial(
        _label_smooth_kernel,
        smoothing=float(smoothing),
        off_val=off_val,
        n_valid=N,
        rows_per_split=rows_per_split,
        tb=tb,
    )

    partials = pl.pallas_call(
        kernel,
        out_shape=jax.ShapeDtypeStruct((n_splits, 8, 128), jnp.float32),
        grid_spec=pltpu.PrefetchScalarGridSpec(
            num_scalar_prefetch=0,
            grid=(n_splits, steps),
            in_specs=[
                pl.BlockSpec((tb, C), lambda c, i: (c * steps + i, 0)),
                pl.BlockSpec((tb, 1), lambda c, i: (c * steps + i, 0)),
            ],
            out_specs=pl.BlockSpec((1, 8, 128), lambda c, i: (c, 0, 0)),
            scratch_shapes=[pltpu.VMEM((tb, 1), jnp.float32)],
        ),
        compiler_params=pltpu.CompilerParams(
            dimension_semantics=("parallel", "arbitrary"),
            vmem_limit_bytes=vmem_limit_bytes,
        ),
    )(x2, t2)

    return jnp.sum(partials[:, 0, 0]) / N


def _reference_loss(logits, target, smoothing=0.1):
    """Pure-JAX reference mirroring the PyTorch module."""
    C = logits.shape[-1]
    log_prob = jax.nn.log_softmax(logits.astype(jnp.float32), axis=-1)
    weight = jnp.full(logits.shape, smoothing / (C - 1.0), dtype=jnp.float32)
    onehot = jax.nn.one_hot(target, C, dtype=jnp.float32)
    weight = weight * (1.0 - onehot) + (1.0 - smoothing) * onehot
    return jnp.mean(jnp.sum(-weight * log_prob, axis=-1))


if __name__ == "__main__":
    key = jax.random.PRNGKey(0)
    k1, k2 = jax.random.split(key)

    # Small shapes: batch=2, seq=7, classes=32 -> N=14 (exercises the
    # remainder/padding + masking path, since 14 is not a multiple of 8).
    B, S, C = 2, 7, 32
    smoothing = 0.1

    logits = jax.random.normal(k1, (B, S, C), dtype=jnp.float32)
    target = jax.random.randint(k2, (B, S), 0, C, dtype=jnp.int32)

    loss = jax.block_until_ready(label_smooth_loss(logits, target, smoothing))
    ref = jax.block_until_ready(_reference_loss(logits, target, smoothing))
    assert jnp.allclose(loss, ref, atol=1e-5, rtol=1e-5), (loss, ref)

    print("KERNEL_OK")
</pallas_src>

<mosaic_0001>
module attributes {stable_mosaic.version = 11 : i64} {
  func.func @_label_smooth_kernel(%arg0: i32, %arg1: i32, %arg2: memref<8x32xf32, #tpu.memory_space<vmem>>, %arg3: memref<8x1xi32, #tpu.memory_space<vmem>>, %arg4: memref<1x8x128xf32, #tpu.memory_space<vmem>>, %arg5: memref<8x1xf32, #tpu.memory_space<vmem>>) attributes {dimension_semantics = [#tpu.dimension_semantics<parallel>, #tpu.dimension_semantics<arbitrary>], iteration_bounds = array<i64: 2, 1>, scalar_prefetch = 0 : i64, scratch_operands = 1 : i64, tpu.core_type = #tpu.core_type<tc>, window_params = [{transform_indices = @transform_0, window_bounds = array<i64: 8, 32>}, {transform_indices = @transform_1, window_bounds = array<i64: 8, 1>}, {transform_indices = @transform_2, window_bounds = array<i64: 1, 8, 128>}]} {
    %c0_i32 = arith.constant 0 : i32
    %0 = arith.cmpi eq, %arg1, %c0_i32 : i32
    %1 = arith.extui %0 : i1 to i32
    %c0_i32_0 = arith.constant 0 : i32
    %2 = arith.cmpi ne, %1, %c0_i32_0 : i32
    scf.if %2 {
      %cst_18 = arith.constant 0.000000e+00 : f32
      %45 = vector.broadcast %cst_18 : f32 to vector<8x1xf32>
      %c0_19 = arith.constant 0 : index
      %c0_20 = arith.constant 0 : index
      %46 = vector.load %arg5[%c0_19, %c0_20] : memref<8x1xf32, #tpu.memory_space<vmem>>, vector<8x1xf32>
      tpu.vector_store %arg5[%c0_19, %c0_20], %45 {strides = array<i32>} : memref<8x1xf32, #tpu.memory_space<vmem>>, vector<8x1xf32>,
    } else {
    }
    %c0 = arith.constant 0 : index
    %c0_1 = arith.constant 0 : index
    %3 = vector.load %arg2[%c0, %c0_1] : memref<8x32xf32, #tpu.memory_space<vmem>>, vector<8x32xf32>
    %c0_2 = arith.constant 0 : index
    %c0_3 = arith.constant 0 : index
    %4 = vector.load %arg3[%c0_2, %c0_3] : memref<8x1xi32, #tpu.memory_space<vmem>>, vector<8x1xi32>
    %cst = arith.constant dense<0xFF800000> : vector<8xf32>
    %5 = vector.multi_reduction <maximumf>, %3, %cst [1] : vector<8x32xf32> to vector<8xf32>
    %6 = vector.shape_cast %5 : vector<8xf32> to vector<8x1xf32>
    %7 = vector.broadcast %6 : vector<8x1xf32> to vector<8x32xf32>
    %8 = arith.subf %3, %7 : vector<8x32xf32>
    %9 = math.exp %8 : vector<8x32xf32>
    %cst_4 = arith.constant dense<0.000000e+00> : vector<8xf32>
    %10 = vector.multi_reduction <add>, %9, %cst_4 [1] : vector<8x32xf32> to vector<8xf32>
    %11 = vector.shape_cast %10 : vector<8xf32> to vector<8x1xf32>
    %12 = math.log %11 : vector<8x1xf32>
    %13 = arith.addf %12, %6 : vector<8x1xf32>
    %14 = tpu.iota {dimensions = array<i32: 1>} : vector<8x32xi32>
    %15 = vector.broadcast %4 : vector<8x1xi32> to vector<8x32xi32>
    %16 = arith.cmpi eq, %14, %15 : vector<8x32xi32>
    %cst_5 = arith.constant 0.000000e+00 : f32
    %17 = vector.broadcast %cst_5 : f32 to vector<8x32xf32>
    %18 = arith.select %16, %3, %17 : vector<8x32xi1>, vector<8x32xf32>
    %cst_6 = arith.constant dense<0.000000e+00> : vector<8xf32>
    %19 = vector.multi_reduction <add>, %18, %cst_6 [1] : vector<8x32xf32> to vector<8xf32>
    %20 = vector.shape_cast %19 : vector<8xf32> to vector<8x1xf32>
    %cst_7 = arith.constant dense<0.000000e+00> : vector<8xf32>
    %21 = vector.multi_reduction <add>, %3, %cst_7 [1] : vector<8x32xf32> to vector<8xf32>
    %22 = vector.shape_cast %21 : vector<8xf32> to vector<8x1xf32>
    %cst_8 = arith.constant 0.896774172 : f32
    %23 = vector.broadcast %cst_8 : f32 to vector<8x1xf32>
    %24 = arith.mulf %23, %20 : vector<8x1xf32>
    %cst_9 = arith.constant 0.0032258064 : f32
    %25 = vector.broadcast %cst_9 : f32 to vector<8x1xf32>
    %26 = arith.mulf %25, %22 : vector<8x1xf32>
    %27 = arith.addf %24, %26 : vector<8x1xf32>
    %28 = arith.subf %13, %27 : vector<8x1xf32>
    %c8_i32 = arith.constant 8 : i32
    %29 = arith.muli %arg0, %c8_i32 : i32
    %c8_i32_10 = arith.constant 8 : i32
    %30 = arith.muli %arg1, %c8_i32_10 : i32
    %31 = arith.addi %29, %30 : i32
    %32 = tpu.iota {dimensions = array<i32: 0>} : vector<8x1xi32>
    %33 = vector.broadcast %31 : i32 to vector<8x1xi32>
    %34 = arith.addi %33, %32 : vector<8x1xi32>
    %c14_i32 = arith.constant 14 : i32
    %35 = vector.broadcast %c14_i32 : i32 to vector<8x1xi32>
    %36 = arith.cmpi slt, %34, %35 : vector<8x1xi32>
    %cst_11 = arith.constant 0.000000e+00 : f32
    %37 = vector.broadcast %cst_11 : f32 to vector<8x1xf32>
    %38 = arith.select %36, %28, %37 : vector<8x1xi1>, vector<8x1xf32>
    %c0_12 = arith.constant 0 : index
    %c0_13 = arith.constant 0 : index
    %39 = vector.load %arg5[%c0_12, %c0_13] : memref<8x1xf32, #tpu.memory_space<vmem>>, vector<8x1xf32>
    %40 = arith.addf %39, %38 : vector<8x1xf32>
    %c0_14 = arith.constant 0 : index
    %c0_15 = arith.constant 0 : index
    %41 = vector.load %arg5[%c0_14, %c0_15] : memref<8x1xf32, #tpu.memory_space<vmem>>, vector<8x1xf32>
    tpu.vector_store %arg5[%c0_14, %c0_15], %40 {strides = array<i32>} : memref<8x1xf32, #tpu.memory_space<vmem>>, vector<8x1xf32>,
    %c0_i32_16 = arith.constant 0 : i32
    %42 = arith.cmpi eq, %arg1, %c0_i32_16 : i32
    %43 = arith.extui %42 : i1 to i32
    %c0_i32_17 = arith.constant 0 : i32
    %44 = arith.cmpi ne, %43, %c0_i32_17 : i32
    scf.if %44 {
      %c0_18 = arith.constant 0 : index
      %c0_19 = arith.constant 0 : index
      %45 = vector.load %arg5[%c0_18, %c0_19] : memref<8x1xf32, #tpu.memory_space<vmem>>, vector<8x1xf32>
      %46 = vector.shape_cast %45 : vector<8x1xf32> to vector<1x8x1xf32>
      %cst_20 = arith.constant dense<0.000000e+00> : vector<1xf32>
      %47 = vector.multi_reduction <add>, %46, %cst_20 [1, 2] : vector<1x8x1xf32> to vector<1xf32>
      %48 = vector.shape_cast %47 : vector<1xf32> to vector<1x1x1xf32>
      %49 = vector.extract %48[0, 0, 0] : f32 from vector<1x1x1xf32>
      %50 = vector.broadcast %49 : f32 to vector<1x8x128xf32>
      %c0_21 = arith.constant 0 : index
      %c0_22 = arith.constant 0 : index
      %c0_23 = arith.constant 0 : index
      %51 = vector.load %arg4[%c0_21, %c0_22, %c0_23] : memref<1x8x128xf32, #tpu.memory_space<vmem>>, vector<1x8x128xf32>
      tpu.vector_store %arg4[%c0_21, %c0_22, %c0_23], %50 {strides = array<i32>} : memref<1x8x128xf32, #tpu.memory_space<vmem>>, vector<1x8x128xf32>,
    } else {
    }
    return
  }
  func.func @transform_0(%arg0: i32, %arg1: i32) -> (i32, i32) {
    %c1_i32 = arith.constant 1 : i32
    %0 = arith.muli %arg0, %c1_i32 : i32
    %1 = arith.addi %0, %arg1 : i32
    %c0_i32 = arith.constant 0 : i32
    %c0_i32_0 = arith.constant 0 : i32
    return %1, %c0_i32 : i32, i32
  }
  func.func @transform_1(%arg0: i32, %arg1: i32) -> (i32, i32) {
    %c1_i32 = arith.constant 1 : i32
    %0 = arith.muli %arg0, %c1_i32 : i32
    %1 = arith.addi %0, %arg1 : i32
    %c0_i32 = arith.constant 0 : i32
    %c0_i32_0 = arith.constant 0 : i32
    return %1, %c0_i32 : i32, i32
  }
  func.func @transform_2(%arg0: i32, %arg1: i32) -> (i32, i32, i32) {
    %c0_i32 = arith.constant 0 : i32
    %c0_i32_0 = arith.constant 0 : i32
    %c0_i32_1 = arith.constant 0 : i32
    return %arg0, %c0_i32, %c0_i32_0 : i32, i32, i32
  }
}

</mosaic_0001>

<llo_original>
// kernel: tpu_custom_call.1
$region0: #{tpu_custom_call.1}
  #allocation0 [shape = 'u32[]', space=smem, size = 0x4, offset = 0x4, fixed_abs, tag = 'smem constant byte address 0x4 - core index']
  #allocation1 [shape = 'u32[144,128]{1,0:T(1,128)}', space=vmem, size = 0x12000, scoped, tag = 'internal scratch']
  #allocation2 [shape = 'f32[8,1]{1,0:T(8,128)}', space=vmem, size = 0x1000, scoped, tag = 'scratch operand']
  %s0 = inlined_call_operand.vmem [shape: f32[16,32], index: 0, kind: input, shape index: {}]
  %s1 = inlined_call_operand.vmem [shape: s32[16,1], index: 1, kind: input, shape index: {}]
  %s2 = inlined_call_operand.hbm [shape: f32[2,8,128], index: 2, kind: output, shape index: {}]
  %s3 = sld [smem:[#allocation0]]
  $region49: #{tpu_custom_call.1} parent=0
    _
  %s5 = ssub.s32 1, %s3
  %s6 = scalar_select 0, %s5, %s3
  $region1: #{tpu_custom_call.1} parent=0
    #allocation3 [shape = 'u8[8192]{0}', space=vmem, size = 0x2000, scoped, tag = 'output window, operand 0']
    #allocation4 [shape = 's32[2]{0}', space=sflag, size = 0x8, scoped, tag = 'scoped memory for tpu_custom_call.1']
    %7 = vsyncpa [#allocation4], 0
    %s8 = scalar_lea.sflag [#allocation4], 1
    %9 = vsyncpa %s8, 0
    loop: start=0, step=1, limit=4
    $region2: #{tpu_custom_call.1} parent=1 // loop_pre_header
      _
    $region3: #{tpu_custom_call.1} parent=1 // loop_header
      %s11 = sphi 0, %s15
      %p12 = scmp.ge.s32.totalorder %s11, 4
      %s18 = sphi 0, %s30
      %s19 = sphi 0, %s26
      %s20 = sphi 0, %s18
      %s21 = sphi 0, %s19
      %s22 = sphi 0, %s20
      %s23 = sphi 0, %s21
      %s35 = sphi 0, %s37
      %s38 = sphi 0, %s35
      %s39 = sphi 0, %s38
      %s55 = sphi 0, %s39
      %s63 = sphi 0, %s65
      %s66 = sphi 0, %s63
      %s67 = sphi 0, %s66
      %s83 = sphi 0, %s67
      %s89 = sphi 0, %s91
      %s92 = sphi 0, %s89
      %s93 = sphi 0, %s92
      %s109 = sphi 0, %s93
    $region4: #{tpu_custom_call.1} parent=1 // loop_header_branch
      %14 = sbr.rel (%p12) target = $region8
    $region5: #{tpu_custom_call.1} parent=1 // loop_body
      %s16 = ssub.s32 %s11, 1
      %s17 = ssub.s32 %s11, 2
      %s24 = sadd.s32 1, %s19
      %p25 = scmp.ge.s32.totalorder %s24, 1
      %s26 = scalar_select %p25, 0, %s24
      %s27 = sadd.s32 1, %s18
      %s28 = scalar_select %p25, %s27, %s18
      %p29 = scmp.ge.s32.totalorder %s28, 2
      %s30 = scalar_select %p29, 0, %s28
      %s31 = sadd.s32 %s18, %s19
      %s32 = sadd.s32 %s30, %s26
      %s33 = ssub.s32 %s31, %s32
      %p34 = scmp.eq.s32.totalorder %s33, 0
      %s36 = sadd.s32 %s35, 1
      %s37 = scalar_select %p34, %s35, %s36
      %p40 = pneg %p34
      %p41 = scmp.eq.s32.totalorder %s11, 1
      %p42 = por %p40, %p41
      %p43 = scmp.ne.s32.totalorder %s35, %s38
      %p44 = scmp.eq.s32.totalorder %s11, 0
      %p45 = por %p43, %p44
      %p46 = scmp.ne.s32.totalorder %s35, %s38
      %p47 = scmp.eq.s32.totalorder %s16, 1
      %p48 = por %p46, %p47
      %p49 = scmp.ne.s32.totalorder %s38, %s39
      %p50 = scmp.eq.s32.totalorder %s16, 0
      %p51 = por %p49, %p50
      %p52 = scmp.ne.s32.totalorder %s38, %s39
      %p53 = scmp.eq.s32.totalorder %s17, 1
      %p54 = por %p52, %p53
      %p56 = scmp.ne.s32.totalorder %s39, %s55
      %p57 = scmp.eq.s32.totalorder %s17, 0
      %p58 = por %p56, %p57
      %s59 = sadd.s32 %s18, %s19
      %s60 = sadd.s32 %s30, %s26
      %s61 = ssub.s32 %s59, %s60
      %p62 = scmp.eq.s32.totalorder %s61, 0
      %s64 = sadd.s32 %s63, 1
      %s65 = scalar_select %p62, %s63, %s64
      %p68 = pneg %p62
      %p69 = scmp.eq.s32.totalorder %s11, 1
      %p70 = por %p68, %p69
      %p71 = scmp.ne.s32.totalorder %s63, %s66
      %p72 = scmp.eq.s32.totalorder %s11, 0
      %p73 = por %p71, %p72
      %p74 = scmp.ne.s32.totalorder %s63, %s66
      %p75 = scmp.eq.s32.totalorder %s16, 1
      %p76 = por %p74, %p75
      %p77 = scmp.ne.s32.totalorder %s66, %s67
      %p78 = scmp.eq.s32.totalorder %s16, 0
      %p79 = por %p77, %p78
      %p80 = scmp.ne.s32.totalorder %s66, %s67
      %p81 = scmp.eq.s32.totalorder %s17, 1
      %p82 = por %p80, %p81
      %p84 = scmp.ne.s32.totalorder %s67, %s83
      %p85 = scmp.eq.s32.totalorder %s17, 0
      %p86 = por %p84, %p85
      %s87 = ssub.s32 %s18, %s30
      %p88 = scmp.eq.s32.totalorder %s87, 0
      %s90 = sadd.s32 %s89, 1
      %s91 = scalar_select %p88, %s89, %s90
      %p94 = pneg %p88
      %p95 = scmp.eq.s32.totalorder %s11, 1
      %p96 = por %p94, %p95
      %p97 = scmp.ne.s32.totalorder %s89, %s92
      %p98 = scmp.eq.s32.totalorder %s11, 0
      %p99 = por %p97, %p98
      %p100 = scmp.ne.s32.totalorder %s89, %s92
      %p101 = scmp.eq.s32.totalorder %s16, 1
      %p102 = por %p100, %p101
      %p103 = scmp.ne.s32.totalorder %s92, %s93
      %p104 = scmp.eq.s32.totalorder %s16, 0
      %p105 = por %p103, %p104
      %p106 = scmp.ne.s32.totalorder %s92, %s93
      %p107 = scmp.eq.s32.totalorder %s17, 1
      %p108 = por %p106, %p107
      %p110 = scmp.ne.s32.totalorder %s93, %s109
      %p111 = scmp.eq.s32.totalorder %s17, 0
      %p112 = por %p110, %p111
      %p113 = scmp.le.s32.totalorder 1, %s11
      %p114 = scmp.lt.s32.totalorder %s11, 3
      %p115 = pnand %p113, %p114
      %p116 = pneg %p115
      // Predicated region
      $region9: #{tpu_custom_call.1} parent=5 // pred_check
        _
      $region10: #{tpu_custom_call.1} parent=5 // pred_check_branch
        %118 = sbr.rel (%p115) target = $region12
      $region11: #{tpu_custom_call.1} parent=5 // pred_region
        %s119 = ssub.s32 %s11, 1
      $region12: #{tpu_custom_call.1} parent=5 // pred_fallthru
        _
      %p120 = scmp.lt.s32.totalorder %s11, 2
      // Predicated region
      $region13: #{tpu_custom_call.1} parent=5 // pred_check
        %p121 = pneg %p120
      $region14: #{tpu_custom_call.1} parent=5 // pred_check_branch
        %123 = sbr.rel (%p121) target = $region16
      $region15: #{tpu_custom_call.1} parent=5 // pred_region
        // Predicated region
        $region17: #{tpu_custom_call.1} parent=15 // pred_check
          %p124 = pneg %p45
        $region18: #{tpu_custom_call.1} parent=15 // pred_check_branch
          %126 = sbr.rel (%p124) target = $region20
        $region19: #{tpu_custom_call.1} parent=15 // pred_region
          %s127 = sadd.s32 %s18, %s19
          %p128 = scmp.lt.s32.totalorder %s127, 1
          %s129 = scalar_select %p128, %s127, 1
          %s130 = smul.addr %s129, 8
          %s131 = scalar_lea.vmem %s0, %s130
          %s132 = sadd.s32 %s18, %s19
        $region20: #{tpu_custom_call.1} parent=15 // pred_fallthru
          _
        // Predicated region
        $region21: #{tpu_custom_call.1} parent=15 // pred_check
          %p133 = pneg %p73
        $region22: #{tpu_custom_call.1} parent=15 // pred_check_branch
          %135 = sbr.rel (%p133) target = $region24
        $region23: #{tpu_custom_call.1} parent=15 // pred_region
          %s136 = sadd.s32 %s18, %s19
          %p137 = scmp.lt.s32.totalorder %s136, 1
          %s138 = scalar_select %p137, %s136, 1
          %s139 = smul.addr %s138, 8
          %s140 = scalar_lea.vmem %s1, %s139
          %s141 = sadd.s32 %s18, %s19
        $region24: #{tpu_custom_call.1} parent=15 // pred_fallthru
          _
      $region16: #{tpu_custom_call.1} parent=5 // pred_fallthru
        _
      %p142 = scmp.le.s32.totalorder 1, %s11
      %p143 = scmp.lt.s32.totalorder %s11, 3
      %p144 = pnand %p142, %p143
      %p145 = pneg %p144
      // Predicated region
      $region25: #{tpu_custom_call.1} parent=5 // pred_check
        _
      $region26: #{tpu_custom_call.1} parent=5 // pred_check_branch
        %147 = sbr.rel (%p144) target = $region28
      $region27: #{tpu_custom_call.1} parent=5 // pred_region
        %s148 = ssub.s32 %s11, 1
        %s149 = sadd.s32 %s20, %s21
        %p150 = scmp.lt.s32.totalorder %s149, 1
        %s151 = scalar_select %p150, %s149, 1
        %s152 = smul.addr %s151, 8
        %s153 = scalar_lea.vmem %s0, %s152
        %p154 = pneg %p51
        %p155 = pneg %p48
        %s156 = sadd.s32 %s20, %s21
        %p157 = scmp.lt.s32.totalorder %s156, 1
        %s158 = scalar_select %p157, %s156, 1
        %s159 = smul.addr %s158, 8
        %s160 = scalar_lea.vmem %s1, %s159
        %p161 = pneg %p79
        %p162 = pneg %p76
        %p163 = pneg %p105
        %p164 = pneg %p102
        %s165 = sand.u32 %s92, 1
        %s166 = scalar_lea.sflag [#allocation4], %s165
        %s167 = sand.u32 %s92, 1
        %s168 = smul.addr %s167, 8
        %s169 = scalar_lea.vmem [#allocation3], %s168
        %s170 = sadd.s32 %s20, %s21
        %p171 = scmp.lt.s32.totalorder %s170, 1
        %s172 = scalar_select %p171, %s170, 1
        %s173 = smul.addr %s172, 8
        %s174 = scalar_lea.vmem %s0, %s173
        %s175 = sadd.s32 %s20, %s21
        %s176 = sadd.s32 %s20, %s21
        %p177 = scmp.lt.s32.totalorder %s176, 1
        %s178 = scalar_select %p177, %s176, 1
        %s179 = smul.addr %s178, 8
        %s180 = scalar_lea.vmem %s1, %s179
        %s181 = sadd.s32 %s20, %s21
        %p182 = scmp.eq.s32.totalorder %s21, 0
        // Predicated region
        $region29: #{tpu_custom_call.1} parent=27 // pred_check
          %p183 = pneg %p182
        $region30: #{tpu_custom_call.1} parent=27 // pred_check_branch
          %185 = sbr.rel (%p183) target = $region32
        $region31: #{tpu_custom_call.1} parent=27 // pred_region
          %vm186 = vcmask 7168
          %187 = vst.msk [vmem:[#allocation2] sm:$0xff] %vm186, 0.0
        $region32: #{tpu_custom_call.1} parent=27 // pred_fallthru
          _
        %v188 = vld [vmem:[%s174] sm:$0xff]
        %v189 = vld [vmem:[%s180] sm:$0xff]
        %vm190 = vcmask 261120
        %v191 = vsel %vm190, %v188, -inf
        %192 = vmax.xlane.f32.xlu0 %v191
        %v193 = vpop.xlane.xlu0 %192
        %v194 = vsub.f32 %v188, %v193
        %v195 = vmul.f32 %v194, 1.442695
        %v196 = vpow.pop %v195
        %v197 = vsel %vm190, %v196, 0.0
        %198 = vadd.xlane.f32.xlu0 %v197
        %v199 = vpop.xlane.xlu0 %198
        %v200 = vlog2.pop %v199
        %v201 = vmul.f32 %v200, 0.6931472
        %v202 = vadd.f32 %v201, %v193
        %v203 = vlaneseq
        %v204 = vand.u32 %v203, 127
        %205 = vset.pattern.permute.xlu0 0
        %206 = vperm.xlu0 %205, %v189
        %v207 = vpop.permute.xlu0 %206
        %vm208 = vcmp.eq.s32.totalorder %v204, %v207
        %v209 = vsel %vm208, %v188, 0.0
        %v210 = vsel %vm190, %v209, 0.0
        %211 = vadd.xlane.f32.xlu0 %v210
        %v212 = vpop.xlane.xlu0 %211
        %v213 = vsel %vm190, %v188, 0.0
        %214 = vadd.xlane.f32.xlu0 %v213
        %v215 = vpop.xlane.xlu0 %214
        %v216 = vmul.f32 %v212, 0.8967742
        %v217 = vmul.f32 %v215, 0.0032258064
        %v218 = vadd.f32 %v216, %v217
        %v219 = vsub.f32 %v202, %v218
        %s220 = smul.u32 %s20, 8
        %s221 = smul.u32 %s21, 8
        %s222 = sadd.s32 %s220, %s221
        %v223 = vlaneseq
        %v224 = vshrl.u32 %v223, 7
        %v225 = vstv %s222
        %v226 = vadd.s32 %v225, %v224
        %vm227 = vcmp.lt.s32.totalorder %v226, 14
        %v228 = vsel %vm227, %v219, 0.0
        %v229 = vld [vmem:[#allocation2] sm:$0xff]
        %v230 = vadd.f32 %v229, %v228
        %vm231 = vcmask 7168
        %232 = vst.msk [vmem:[#allocation2] sm:$0xff] %vm231, %v230
        // Predicated region
        $region33: #{tpu_custom_call.1} parent=27 // pred_check
          %p233 = pneg %p182
        $region34: #{tpu_custom_call.1} parent=27 // pred_check_branch
          %235 = sbr.rel (%p233) target = $region36
        $region35: #{tpu_custom_call.1} parent=27 // pred_region
          %v236 = vld [vmem:[#allocation2] sm:$0xff]
          %v237 = vsel %vm231, %v236, 0.0
          %238 = vadd.xlane.f32.xlu0 %v237
          %v239 = vpop.xlane.xlu0 %238
          %v240 = vrot.slane %v239, 4
          %v241 = vadd.f32 %v239, %v240
          %v242 = vrot.slane %v241, 2
          %v243 = vadd.f32 %v241, %v242
          %v244 = vrot.slane %v243, 1
          %v245 = vadd.f32 %v243, %v244
          %s246 = vtos %v245
          %v247 = vstv %s246
          %248 = vst [vmem:[%s169] sm:$0xff] %v247
        $region36: #{tpu_custom_call.1} parent=27 // pred_fallthru
          _
        %s249 = sand.u32 %s92, 1
        %s250 = scalar_lea.sflag [#allocation4], %s249
        %s251 = sand.u32 %s92, 1
        %s252 = smul.addr %s251, 8
        %s253 = scalar_lea.vmem [#allocation3], %s252
        // Predicated region
        $region37: #{tpu_custom_call.1} parent=27 // pred_check
          %p254 = pneg %p102
        $region38: #{tpu_custom_call.1} parent=27 // pred_check_branch
          %256 = sbr.rel (%p254) target = $region40
        $region39: #{tpu_custom_call.1} parent=27 // pred_region
          %s258 = ssub.s32 128, 128
          %259 = vsyncadd %s250, %s258
          %s260 = smul.addr %s20, 128
          %s261 = scalar_lea.hbm %s2, %s260
          %s263 = sshll.u32 %s253, 4
          %s264 = int_to_ptr.vmem [resolvable:$true] %s263
          %266 = dma.vmem_to_hbm [thread:$0]  %s264, 128, %s261, %s250
        $region40: #{tpu_custom_call.1} parent=27 // pred_fallthru
          _
      $region28: #{tpu_custom_call.1} parent=5 // pred_fallthru
        _
      %p267 = scmp.le.s32.totalorder 2, %s11
      // Predicated region
      $region41: #{tpu_custom_call.1} parent=5 // pred_check
        %p268 = pneg %p267
      $region42: #{tpu_custom_call.1} parent=5 // pred_check_branch
        %270 = sbr.rel (%p268) target = $region44
      $region43: #{tpu_custom_call.1} parent=5 // pred_region
        %s271 = ssub.s32 %s11, 2
        // Predicated region
        $region45: #{tpu_custom_call.1} parent=43 // pred_check
          %p272 = pneg %p108
        $region46: #{tpu_custom_call.1} parent=43 // pred_check_branch
          %274 = sbr.rel (%p272) target = $region48
        $region47: #{tpu_custom_call.1} parent=43 // pred_region
          %s275 = sand.u32 %s93, 1
          %s276 = scalar_lea.sflag [#allocation4], %s275
          %s277 = sand.u32 %s93, 1
          %s278 = smul.addr %s277, 8
          %s279 = scalar_lea.vmem [#allocation3], %s278
          %280 = dma.done %s276, 128
        $region48: #{tpu_custom_call.1} parent=43 // pred_fallthru
          _
      $region44: #{tpu_custom_call.1} parent=5 // pred_fallthru
        _
    $region6: #{tpu_custom_call.1} parent=1 // loop_footer
      %s15 = sadd.s32 1, %s11
    $region7: #{tpu_custom_call.1} parent=1 // loop_footer_branch
      %10 = sbr.rel target = $region3
    $region8: #{tpu_custom_call.1} parent=1 // loop_exit
      _
    %281 = vsyncpa [#allocation4], 1
    %s282 = scalar_lea.sflag [#allocation4], 1
    %283 = vsyncpa %s282, 1

</llo_original>
